<compile_context>
chip_gen: v5e
topology: v5e:2x2
jax: 0.10.0
libtpu: 0.0.40
codegen_flags: <defaults>
</compile_context>

<pallas_src>
import functools
import math

import jax
import jax.numpy as jnp
from jax.experimental import pallas as pl
from jax.experimental.pallas import tpu as pltpu  # noqa: F401  (TPU backend / memory spaces)


def _round_up(x, m):
    return (x + m - 1) // m * m


def _bottleneck_kernel(feat_ref, act_ref, w_ref, o_ref, *, chw):
    """Single invocation: copy the `features` half and compute the whole Linear, storing
    conv_actions at its final column offset in the fused, lane-dense output."""
    # features half: columns [0, chw)  (full-sublane, static-slice store)
    o_ref[:, :chw] = feat_ref[...]
    # conv_actions half: columns [chw, chw + n_pad). bf16 x bf16 on the MXU, f32 accumulation.
    acc = jnp.dot(act_ref[...], w_ref[...], preferred_element_type=jnp.float32)
    o_ref[:, chw:] = acc


def init_conv_bottleneck(key, actions, in_channels, out_channels, features=128):
    """Synthetic ConvBottleneck parameters. Only the Linear weight is used by forward();
    self.conv / self.bn exist in the module but are dead code in forward()."""
    del in_channels, out_channels  # only needed by the unused conv/bn
    fhw = features * 8 * 8
    bound = 1.0 / math.sqrt(actions)  # ~ torch nn.Linear default init scale
    w = jax.random.uniform(key, (fhw, actions), jnp.float32, -bound, bound)
    # Pre-pack once: (out, in) -> (in, out) so K (=actions) is the contraction/sublane axis,
    # zero-pad K to a multiple of 16 (bf16 sublane packing) and N to a multiple of 128
    # (lane-dense stores even for odd `features`), cast to bf16 for the MXU.
    k_pad = _round_up(actions, 16)
    n_pad = _round_up(fhw, 128)
    w_packed = jnp.zeros((k_pad, n_pad), jnp.float32)
    w_packed = w_packed.at[:actions, :fhw].set(w.T).astype(jnp.bfloat16)
    return {"features": features, "actions": actions, "w_packed": w_packed}


def conv_bottleneck_forward(params, features, actions):
    B, C, H, W = features.shape
    F = params["features"]
    A = params["actions"]
    assert H * W == 64, "ConvBottleneck reshapes a features*8*8 Linear output to (B, F, H, W)"

    w = params["w_packed"]                      # (k_pad, n_pad), bf16, pre-packed at init
    k_pad, n_pad = w.shape
    chw, fhw = C * H * W, F * H * W
    n_total = chw + n_pad
    b_pad = _round_up(B, 8)                     # full-sublane rows -> unmasked stores

    # Flat, lane-dense layout (free reshape: NCHW is row-major contiguous). Pad rows to
    # b_pad so every in-kernel store is full-sublane; trim with a cheap [:B] slice after.
    feat_p = jnp.zeros((b_pad, chw), jnp.float32).at[:B].set(
        features.reshape(B, chw).astype(jnp.float32))
    act_p = jnp.zeros((b_pad, k_pad), jnp.bfloat16).at[:B, :A].set(
        actions.astype(jnp.bfloat16))

    flops = 2 * b_pad * k_pad * n_pad
    bytes_accessed = (feat_p.size * 4 + act_p.size * 2 + w.size * 2 + b_pad * n_total * 4)

    out_flat = pl.pallas_call(
        functools.partial(_bottleneck_kernel, chw=chw),
        out_shape=jax.ShapeDtypeStruct((b_pad, n_total), jnp.float32),
        # No grid: everything fits VMEM (<1 MiB total), so run the whole fused op in one
        # step and avoid any per-grid-step pipeline overhead.
        in_specs=[
            pl.BlockSpec((b_pad, chw), lambda: (0, 0)),     # features (f32, copied)
            pl.BlockSpec((b_pad, k_pad), lambda: (0, 0)),   # actions  (bf16)
            pl.BlockSpec((k_pad, n_pad), lambda: (0, 0)),   # pre-packed weight (bf16)
        ],
        out_specs=pl.BlockSpec((b_pad, n_total), lambda: (0, 0)),  # lane-dense fused output
        cost_estimate=pl.CostEstimate(
            flops=flops, transcendentals=0, bytes_accessed=bytes_accessed),
    )(feat_p, act_p, w)

    # Drop batch padding and any trailing lane padding of the conv_actions region, then a
    # free reshape back to NCHW: first C channels == features, next F == conv_actions.
    out = out_flat[:B, :chw + fhw]
    return out.reshape(B, C + F, H, W)


if __name__ == "__main__":
    B, C, H, W = 2, 4, 8, 8       # spatial 8x8 is forced by the features*8*8 Linear reshape
    A, F = 16, 128                # number of actions, features (module default)

    key = jax.random.PRNGKey(0)
    k_params, k_feat, k_act = jax.random.split(key, 3)
    params = init_conv_bottleneck(k_params, actions=A, in_channels=C, out_channels=C, features=F)
    features = jax.random.normal(k_feat, (B, C, H, W), jnp.float32)
    actions = jax.random.normal(k_act, (B, A), jnp.float32)

    fwd = jax.jit(lambda f, a: conv_bottleneck_forward(params, f, a))
    out = jax.block_until_ready(fwd(features, actions))

    # Pure-JAX reference using the same bf16-rounded operands (kernel accumulates in f32).
    fhw = F * H * W
    w_f32 = params["w_packed"][:A, :fhw].astype(jnp.float32)              # (A, F*H*W)
    conv_actions_ref = actions.astype(jnp.bfloat16).astype(jnp.float32) @ w_f32
    ref = jnp.concatenate([features, conv_actions_ref.reshape(B, F, H, W)], axis=1)

    assert out.shape == (B, C + F, H, W), out.shape
    assert bool(jnp.all(jnp.isfinite(out)))
    err = float(jnp.max(jnp.abs(out - ref)))
    assert err < 1e-3, err
    print("KERNEL_OK")
</pallas_src>

<mosaic_0001>
module attributes {stable_mosaic.version = 11 : i64} {
  func.func @_bottleneck_kernel(%arg0: memref<8x256xf32, #tpu.memory_space<vmem>>, %arg1: memref<8x16xbf16, #tpu.memory_space<vmem>>, %arg2: memref<16x8192xbf16, #tpu.memory_space<vmem>>, %arg3: memref<8x8448xf32, #tpu.memory_space<vmem>>) attributes {dimension_semantics = [], scalar_prefetch = 0 : i64, scratch_operands = 0 : i64, tpu.core_type = #tpu.core_type<tc>} {
    %c0 = arith.constant 0 : index
    %c0_0 = arith.constant 0 : index
    %0 = vector.load %arg0[%c0, %c0_0] : memref<8x256xf32, #tpu.memory_space<vmem>>, vector<8x256xf32>
    %c0_1 = arith.constant 0 : index
    %c0_2 = arith.constant 0 : index
    %1 = vector.load %arg3[%c0_1, %c0_2] : memref<8x8448xf32, #tpu.memory_space<vmem>>, vector<8x256xf32>
    tpu.vector_store %arg3[%c0_1, %c0_2], %0 {strides = array<i32>} : memref<8x8448xf32, #tpu.memory_space<vmem>>, vector<8x256xf32>,
    %c0_3 = arith.constant 0 : index
    %c0_4 = arith.constant 0 : index
    %2 = vector.load %arg1[%c0_3, %c0_4] : memref<8x16xbf16, #tpu.memory_space<vmem>>, vector<8x16xbf16>
    %c0_5 = arith.constant 0 : index
    %c0_6 = arith.constant 0 : index
    %3 = vector.load %arg2[%c0_5, %c0_6] : memref<16x8192xbf16, #tpu.memory_space<vmem>>, vector<16x8192xbf16>
    %cst = arith.constant dense<0.000000e+00> : vector<8x8192xf32>
    %4 = tpu.matmul %2, %3, %cst {dimension_numbers = #tpu.dot_dimension_numbers<[1], [0], [0], [1], [0, 0, 1, 1], [], []>} : vector<8x16xbf16>, vector<16x8192xbf16>, vector<8x8192xf32> -> vector<8x8192xf32>
    %c0_7 = arith.constant 0 : index
    %c256 = arith.constant 256 : index
    %5 = vector.load %arg3[%c0_7, %c256] : memref<8x8448xf32, #tpu.memory_space<vmem>>, vector<8x8192xf32>
    tpu.vector_store %arg3[%c0_7, %c256], %4 {strides = array<i32>} : memref<8x8448xf32, #tpu.memory_space<vmem>>, vector<8x8192xf32>,
    return
  }
}

</mosaic_0001>

<llo_original>
// kernel: _lambda_.1
$region0: #{_lambda_.1}
  #allocation0 [shape = 'u32[]', space=smem, size = 0x4, offset = 0x4, fixed_abs, tag = 'smem constant byte address 0x4 - core index']
  #allocation1 [shape = 'u32[72,128]{1,0:T(1,128)}', space=vmem, size = 0x9000, scoped, tag = 'internal scratch']
  %s0 = inlined_call_operand.vmem [shape: f32[8,256], index: 0, kind: input, shape index: {}]
  %s1 = inlined_call_operand.vmem [shape: bf16[8,16], index: 1, kind: input, shape index: {}]
  %s2 = inlined_call_operand.hbm [shape: bf16[16,8192], index: 2, kind: input, shape index: {}]
  %s3 = inlined_call_operand.vmem [shape: f32[8,8448], index: 3, kind: output, shape index: {}]
  %s4 = sld [smem:[#allocation0]]
  $region26: #{_lambda_.1} parent=0
    _
  %s6 = ssub.s32 1, %s4
  %s7 = scalar_select 0, %s6, %s4
  $region1: #{_lambda_.1} parent=0
    #allocation2 [shape = 'u8[262144]{0}', space=vmem, size = 0x40000, scoped, tag = 'input window, operand 2, single buffered']
    #allocation3 [shape = 's32[1]{0}', space=sflag, size = 0x4, scoped, tag = 'scoped memory for _lambda_.1']
    %8 = vsyncpa [#allocation3], 0
    // Predicated region
    $region2: #{_lambda_.1} parent=1 // pred_check
      _
    $region3: #{_lambda_.1} parent=1 // pred_check_branch
      %10 = sbr.rel (0) target = $region5
    $region4: #{_lambda_.1} parent=1 // pred_region
      _
    $region5: #{_lambda_.1} parent=1 // pred_fallthru
      _
    // Predicated region
    $region6: #{_lambda_.1} parent=1 // pred_check
      _
    $region7: #{_lambda_.1} parent=1 // pred_check_branch
      %12 = sbr.rel (0) target = $region9
    $region8: #{_lambda_.1} parent=1 // pred_region
      _
    $region9: #{_lambda_.1} parent=1 // pred_fallthru
      _
    // Predicated region
    $region10: #{_lambda_.1} parent=1 // pred_check
      _
    $region11: #{_lambda_.1} parent=1 // pred_check_branch
      %14 = sbr.rel (0) target = $region13
    $region12: #{_lambda_.1} parent=1 // pred_region
      %16 = vsyncadd [#allocation3], 0
      %s17 = sshll.u32 %s2, 4
      %s18 = int_to_ptr.hbm [resolvable:$true] %s17
      %s19 = sshll.u32 [#allocation2], 4
      %s20 = int_to_ptr.vmem [resolvable:$true] %s19
      %25 = dma.hbm_to_vmem [thread:$0]  %s18, 8192, %s20, [#allocation3], 4096, 4096, 256
    $region13: #{_lambda_.1} parent=1 // pred_fallthru
      _
    // Predicated region
    $region14: #{_lambda_.1} parent=1 // pred_check
      _
    $region15: #{_lambda_.1} parent=1 // pred_check_branch
      %27 = sbr.rel (0) target = $region17
    $region16: #{_lambda_.1} parent=1 // pred_region
      %29 = dma.done [#allocation3], 8192
    $region17: #{_lambda_.1} parent=1 // pred_fallthru
      _
    %v31 = vld [vmem:[%s0] sm:$0xff]
    %v32 = vld [vmem:[%s0 + $0x8] sm:$0xff]
    %33 = vst [vmem:[%s3] sm:$0xff] %v31
    %34 = vst [vmem:[%s3 + $0x8] sm:$0xff] %v32
    %v35 = vld [vmem:[%s1] sm:$0xf]
    %v36 = vld [vmem:[#allocation2] sm:$0xff]
    %v37 = vld [vmem:[#allocation2 + $0x8] sm:$0xff]
    %v38 = vld [vmem:[#allocation2 + $0x10] sm:$0xff]
    %v39 = vld [vmem:[#allocation2 + $0x18] sm:$0xff]
    %v40 = vld [vmem:[#allocation2 + $0x20] sm:$0xff]
    %v41 = vld [vmem:[#allocation2 + $0x28] sm:$0xff]
    %v42 = vld [vmem:[#allocation2 + $0x30] sm:$0xff]
    %v43 = vld [vmem:[#allocation2 + $0x38] sm:$0xff]
    %v44 = vld [vmem:[#allocation2 + $0x40] sm:$0xff]
    %v45 = vld [vmem:[#allocation2 + $0x48] sm:$0xff]
    %v46 = vld [vmem:[#allocation2 + $0x50] sm:$0xff]
    %v47 = vld [vmem:[#allocation2 + $0x58] sm:$0xff]
    %v48 = vld [vmem:[#allocation2 + $0x60] sm:$0xff]
    %v49 = vld [vmem:[#allocation2 + $0x68] sm:$0xff]
    %v50 = vld [vmem:[#allocation2 + $0x70] sm:$0xff]
    %v51 = vld [vmem:[#allocation2 + $0x78] sm:$0xff]
    %v52 = vld [vmem:[#allocation2 + $0x80] sm:$0xff]
    %v53 = vld [vmem:[#allocation2 + $0x88] sm:$0xff]
    %v54 = vld [vmem:[#allocation2 + $0x90] sm:$0xff]
    %v55 = vld [vmem:[#allocation2 + $0x98] sm:$0xff]
    %v56 = vld [vmem:[#allocation2 + $0xa0] sm:$0xff]
    %v57 = vld [vmem:[#allocation2 + $0xa8] sm:$0xff]
    %v58 = vld [vmem:[#allocation2 + $0xb0] sm:$0xff]
    %v59 = vld [vmem:[#allocation2 + $0xb8] sm:$0xff]
    %v60 = vld [vmem:[#allocation2 + $0xc0] sm:$0xff]
    %v61 = vld [vmem:[#allocation2 + $0xc8] sm:$0xff]
    %v62 = vld [vmem:[#allocation2 + $0xd0] sm:$0xff]
    %v63 = vld [vmem:[#allocation2 + $0xd8] sm:$0xff]
    %v64 = vld [vmem:[#allocation2 + $0xe0] sm:$0xff]
    %v65 = vld [vmem:[#allocation2 + $0xe8] sm:$0xff]
    %v66 = vld [vmem:[#allocation2 + $0xf0] sm:$0xff]
    %v67 = vld [vmem:[#allocation2 + $0xf8] sm:$0xff]
    %v68 = vld [vmem:[#allocation2 + $0x100] sm:$0xff]
    %v69 = vld [vmem:[#allocation2 + $0x108] sm:$0xff]
    %v70 = vld [vmem:[#allocation2 + $0x110] sm:$0xff]
    %v71 = vld [vmem:[#allocation2 + $0x118] sm:$0xff]
    %v72 = vld [vmem:[#allocation2 + $0x120] sm:$0xff]
    %v73 = vld [vmem:[#allocation2 + $0x128] sm:$0xff]
    %v74 = vld [vmem:[#allocation2 + $0x130] sm:$0xff]
    %v75 = vld [vmem:[#allocation2 + $0x138] sm:$0xff]
    %v76 = vld [vmem:[#allocation2 + $0x140] sm:$0xff]
    %v77 = vld [vmem:[#allocation2 + $0x148] sm:$0xff]
    %v78 = vld [vmem:[#allocation2 + $0x150] sm:$0xff]
    %v79 = vld [vmem:[#allocation2 + $0x158] sm:$0xff]
    %v80 = vld [vmem:[#allocation2 + $0x160] sm:$0xff]
    %v81 = vld [vmem:[#allocation2 + $0x168] sm:$0xff]
    %v82 = vld [vmem:[#allocation2 + $0x170] sm:$0xff]
    %v83 = vld [vmem:[#allocation2 + $0x178] sm:$0xff]
    %v84 = vld [vmem:[#allocation2 + $0x180] sm:$0xff]
    %v85 = vld [vmem:[#allocation2 + $0x188] sm:$0xff]
    %v86 = vld [vmem:[#allocation2 + $0x190] sm:$0xff]
    %v87 = vld [vmem:[#allocation2 + $0x198] sm:$0xff]
    %v88 = vld [vmem:[#allocation2 + $0x1a0] sm:$0xff]
    %v89 = vld [vmem:[#allocation2 + $0x1a8] sm:$0xff]
    %v90 = vld [vmem:[#allocation2 + $0x1b0] sm:$0xff]
    %v91 = vld [vmem:[#allocation2 + $0x1b8] sm:$0xff]
    %v92 = vld [vmem:[#allocation2 + $0x1c0] sm:$0xff]
    %v93 = vld [vmem:[#allocation2 + $0x1c8] sm:$0xff]
    %v94 = vld [vmem:[#allocation2 + $0x1d0] sm:$0xff]
    %v95 = vld [vmem:[#allocation2 + $0x1d8] sm:$0xff]
    %v96 = vld [vmem:[#allocation2 + $0x1e0] sm:$0xff]
    %v97 = vld [vmem:[#allocation2 + $0x1e8] sm:$0xff]
    %v98 = vld [vmem:[#allocation2 + $0x1f0] sm:$0xff]
    %v99 = vld [vmem:[#allocation2 + $0x1f8] sm:$0xff]
    %v164 = vunpack.c.l.b16 %v36
    %v165 = vunpack.c.h.b16 %v36
    %v166 = vunpack.c.l.b16 %v37
    %v167 = vunpack.c.h.b16 %v37
    %v168 = vunpack.c.l.b16 %v38
    %v169 = vunpack.c.h.b16 %v38
    %v170 = vunpack.c.l.b16 %v39
    %v171 = vunpack.c.h.b16 %v39
    %v172 = vunpack.c.l.b16 %v40
    %v173 = vunpack.c.h.b16 %v40
    %v174 = vunpack.c.l.b16 %v41
    %v175 = vunpack.c.h.b16 %v41
    %v176 = vunpack.c.l.b16 %v42
    %v177 = vunpack.c.h.b16 %v42
    %v178 = vunpack.c.l.b16 %v43
    %v179 = vunpack.c.h.b16 %v43
    %v180 = vunpack.c.l.b16 %v44
    %v181 = vunpack.c.h.b16 %v44
    %v182 = vunpack.c.l.b16 %v45
    %v183 = vunpack.c.h.b16 %v45
    %v184 = vunpack.c.l.b16 %v46
    %v185 = vunpack.c.h.b16 %v46
    %v186 = vunpack.c.l.b16 %v47
    %v187 = vunpack.c.h.b16 %v47
    %v188 = vunpack.c.l.b16 %v48
    %v189 = vunpack.c.h.b16 %v48
    %v190 = vunpack.c.l.b16 %v49
    %v191 = vunpack.c.h.b16 %v49
    %v192 = vunpack.c.l.b16 %v50
    %v193 = vunpack.c.h.b16 %v50
    %v194 = vunpack.c.l.b16 %v51
    %v195 = vunpack.c.h.b16 %v51
    %v196 = vunpack.c.l.b16 %v52
    %v197 = vunpack.c.h.b16 %v52
    %v198 = vunpack.c.l.b16 %v53
    %v199 = vunpack.c.h.b16 %v53
    %v200 = vunpack.c.l.b16 %v54
    %v201 = vunpack.c.h.b16 %v54
    %v202 = vunpack.c.l.b16 %v55
    %v203 = vunpack.c.h.b16 %v55
    %v204 = vunpack.c.l.b16 %v56
    %v205 = vunpack.c.h.b16 %v56
    %v206 = vunpack.c.l.b16 %v57
    %v207 = vunpack.c.h.b16 %v57
    %v208 = vunpack.c.l.b16 %v58
    %v209 = vunpack.c.h.b16 %v58
    %v210 = vunpack.c.l.b16 %v59
    %v211 = vunpack.c.h.b16 %v59
    %v212 = vunpack.c.l.b16 %v60
    %v213 = vunpack.c.h.b16 %v60
    %v214 = vunpack.c.l.b16 %v61
    %v215 = vunpack.c.h.b16 %v61
    %v216 = vunpack.c.l.b16 %v62
    %v217 = vunpack.c.h.b16 %v62
    %v218 = vunpack.c.l.b16 %v63
    %v219 = vunpack.c.h.b16 %v63
    %v220 = vunpack.c.l.b16 %v64
    %v221 = vunpack.c.h.b16 %v64
    %v222 = vunpack.c.l.b16 %v65
    %v223 = vunpack.c.h.b16 %v65
    %v224 = vunpack.c.l.b16 %v66
    %v225 = vunpack.c.h.b16 %v66
    %v226 = vunpack.c.l.b16 %v67
    %v227 = vunpack.c.h.b16 %v67
    %v228 = vunpack.c.l.b16 %v68
    %v229 = vunpack.c.h.b16 %v68
    %v230 = vunpack.c.l.b16 %v69
    %v231 = vunpack.c.h.b16 %v69
    %v232 = vunpack.c.l.b16 %v70
    %v233 = vunpack.c.h.b16 %v70
    %v234 = vunpack.c.l.b16 %v71
    %v235 = vunpack.c.h.b16 %v71
    %v236 = vunpack.c.l.b16 %v72
    %v237 = vunpack.c.h.b16 %v72
    %v238 = vunpack.c.l.b16 %v73
    %v239 = vunpack.c.h.b16 %v73
    %v240 = vunpack.c.l.b16 %v74
    %v241 = vunpack.c.h.b16 %v74
    %v242 = vunpack.c.l.b16 %v75
    %v243 = vunpack.c.h.b16 %v75
    %v244 = vunpack.c.l.b16 %v76
    %v245 = vunpack.c.h.b16 %v76
    %v246 = vunpack.c.l.b16 %v77
    %v247 = vunpack.c.h.b16 %v77
    %v248 = vunpack.c.l.b16 %v78
    %v249 = vunpack.c.h.b16 %v78
    %v250 = vunpack.c.l.b16 %v79
    %v251 = vunpack.c.h.b16 %v79
    %v252 = vunpack.c.l.b16 %v80
    %v253 = vunpack.c.h.b16 %v80
    %v254 = vunpack.c.l.b16 %v81
    %v255 = vunpack.c.h.b16 %v81
    %v256 = vunpack.c.l.b16 %v82
    %v257 = vunpack.c.h.b16 %v82
    %v258 = vunpack.c.l.b16 %v83
    %v259 = vunpack.c.h.b16 %v83
    %v260 = vunpack.c.l.b16 %v84
    %v261 = vunpack.c.h.b16 %v84
    %v262 = vunpack.c.l.b16 %v85
    %v263 = vunpack.c.h.b16 %v85
    %v264 = vunpack.c.l.b16 %v86
    %v265 = vunpack.c.h.b16 %v86
    %v266 = vunpack.c.l.b16 %v87
    %v267 = vunpack.c.h.b16 %v87
    %v268 = vunpack.c.l.b16 %v88
    %v269 = vunpack.c.h.b16 %v88
    %v270 = vunpack.c.l.b16 %v89
    %v271 = vunpack.c.h.b16 %v89
    %v272 = vunpack.c.l.b16 %v90
    %v273 = vunpack.c.h.b16 %v90
    %v274 = vunpack.c.l.b16 %v91
    %v275 = vunpack.c.h.b16 %v91
    %v276 = vunpack.c.l.b16 %v92
    %v277 = vunpack.c.h.b16 %v92
    %v278 = vunpack.c.l.b16 %v93
    %v279 = vunpack.c.h.b16 %v93
    %v280 = vunpack.c.l.b16 %v94
    %v281 = vunpack.c.h.b16 %v94
    %v282 = vunpack.c.l.b16 %v95
    %v283 = vunpack.c.h.b16 %v95
    %v284 = vunpack.c.l.b16 %v96
    %v285 = vunpack.c.h.b16 %v96
    %v286 = vunpack.c.l.b16 %v97
    %v287 = vunpack.c.h.b16 %v97
    %v288 = vunpack.c.l.b16 %v98
    %v289 = vunpack.c.h.b16 %v98
    %v290 = vunpack.c.l.b16 %v99
    %v291 = vunpack.c.h.b16 %v99
    %v292 = vpack.c.b16 %v228, %v164
    %v293 = vpack.c.b16 %v229, %v165
    %v294 = vpack.c.b16 %v230, %v166
    %v295 = vpack.c.b16 %v231, %v167
    %v296 = vpack.c.b16 %v232, %v168
    %v297 = vpack.c.b16 %v233, %v169
    %v298 = vpack.c.b16 %v234, %v170
    %v299 = vpack.c.b16 %v235, %v171
    %v300 = vpack.c.b16 %v236, %v172
    %v301 = vpack.c.b16 %v237, %v173
    %v302 = vpack.c.b16 %v238, %v174
    %v303 = vpack.c.b16 %v239, %v175
    %v304 = vpack.c.b16 %v240, %v176
    %v305 = vpack.c.b16 %v241, %v177
    %v306 = vpack.c.b16 %v242, %v178
    %v307 = vpack.c.b16 %v243, %v179
    %v308 = vpack.c.b16 %v244, %v180
    %v309 = vpack.c.b16 %v245, %v181
    %v310 = vpack.c.b16 %v246, %v182
    %v311 = vpack.c.b16 %v247, %v183
    %v312 = vpack.c.b16 %v248, %v184
    %v313 = vpack.c.b16 %v249, %v185
    %v314 = vpack.c.b16 %v250, %v186
    %v315 = vpack.c.b16 %v251, %v187
    %v316 = vpack.c.b16 %v252, %v188
    %v317 = vpack.c.b16 %v253, %v189
    %v318 = vpack.c.b16 %v254, %v190
    %v319 = vpack.c.b16 %v255, %v191
    %v320 = vpack.c.b16 %v256, %v192
    %v321 = vpack.c.b16 %v257, %v193
    %v322 = vpack.c.b16 %v258, %v194
    %v323 = vpack.c.b16 %v259, %v195
    %v324 = vpack.c.b16 %v260, %v196
    %v325 = vpack.c.b16 %v261, %v197
    %v326 = vpack.c.b16 %v262, %v198
    %v327 = vpack.c.b16 %v263, %v199
    %v328 = vpack.c.b16 %v264, %v200
    %v329 = vpack.c.b16 %v265, %v201
    %v330 = vpack.c.b16 %v266, %v202
    %v331 = vpack.c.b16 %v267, %v203
    %v332 = vpack.c.b16 %v268, %v204
    %v333 = vpack.c.b16 %v269, %v205
    %v334 = vpack.c.b16 %v270, %v206
    %v335 = vpack.c.b16 %v271, %v207
    %v336 = vpack.c.b16 %v272, %v208
    %v337 = vpack.c.b16 %v273, %v209
    %v338 = vpack.c.b16 %v274, %v210
    %v339 = vpack.c.b16 %v275, %v211
    %v340 = vpack.c.b16 %v276, %v212
    %v341 = vpack.c.b16 %v277, %v213
    %v342 = vpack.c.b16 %v278, %v214
    %v343 = vpack.c.b16 %v279, %v215
    %v344 = vpack.c.b16 %v280, %v216
    %v345 = vpack.c.b16 %v281, %v217
    %v346 = vpack.c.b16 %v282, %v218
    %v347 = vpack.c.b16 %v283, %v219
    %v348 = vpack.c.b16 %v284, %v220
    %v349 = vpack.c.b16 %v285, %v221
    %v350 = vpack.c.b16 %v286, %v222
    %v351 = vpack.c.b16 %v287, %v223
    %v352 = vpack.c.b16 %v288, %v224
    %v353 = vpack.c.b16 %v289, %v225
    %v354 = vpack.c.b16 %v290, %v226
    %v355 = vpack.c.b16 %v291, %v227
    %vm420 = vcmask 130048
    %v422 = vsel %vm420, %v35, 0
    %424 = vmatpush.bf16.msra.mxu0 0
    %425 = vmatpush.bf16.msra.mxu0 0
    %426 = vmatpush.bf16.msra.mxu0 0
    %427 = vmatpush.bf16.msra.mxu0 0
    %428 = vmatpush.bf16.msra.mxu0 0
    %429 = vmatpush.bf16.msra.mxu0 0
    %430 = vmatpush.bf16.msra.mxu0 0
    %431 = vmatpush.bf16.msra.mxu0 %v292
    %432 = vmatmul.bf16.gmra.mxu0 %v422
    %v433 = vpop.f32.mrf.mxu0
    %v434 = vadd.f32 0.0, %v433
    %v435 = vpop.f32.mrf.mxu0
    %436 = vdwg.mxu0
    %437 = vmatpush.bf16.msra.mxu0 0
    %438 = vmatpush.bf16.msra.mxu0 0
    %439 = vmatpush.bf16.msra.mxu0 0
    %440 = vmatpush.bf16.msra.mxu0 0
    %441 = vmatpush.bf16.msra.mxu0 0
    %442 = vmatpush.bf16.msra.mxu0 0
    %443 = vmatpush.bf16.msra.mxu0 0
    %444 = vmatpush.bf16.msra.mxu0 %v293
    %445 = vmatmul.bf16.gmra.mxu0 %v422
    %v446 = vpop.f32.mrf.mxu0
    %v447 = vadd.f32 0.0, %v446
    %v448 = vpop.f32.mrf.mxu0
    %449 = vdwg.mxu0
    %450 = vmatpush.bf16.msra.mxu0 0
    %451 = vmatpush.bf16.msra.mxu0 0
    %452 = vmatpush.bf16.msra.mxu0 0
    %453 = vmatpush.bf16.msra.mxu0 0
    %454 = vmatpush.bf16.msra.mxu0 0
    %455 = vmatpush.bf16.msra.mxu0 0
    %456 = vmatpush.bf16.msra.mxu0 0
    %457 = vmatpush.bf16.msra.mxu0 %v294
    %458 = vmatmul.bf16.gmra.mxu0 %v422
    %v459 = vpop.f32.mrf.mxu0
    %v460 = vadd.f32 0.0, %v459
    %v461 = vpop.f32.mrf.mxu0
    %462 = vdwg.mxu0
    %463 = vmatpush.bf16.msra.mxu0 0
    %464 = vmatpush.bf16.msra.mxu0 0
    %465 = vmatpush.bf16.msra.mxu0 0
    %466 = vmatpush.bf16.msra.mxu0 0
    %467 = vmatpush.bf16.msra.mxu0 0
    %468 = vmatpush.bf16.msra.mxu0 0
    %469 = vmatpush.bf16.msra.mxu0 0
    %470 = vmatpush.bf16.msra.mxu0 %v295
    %471 = vmatmul.bf16.gmra.mxu0 %v422
    %v472 = vpop.f32.mrf.mxu0
    %v473 = vadd.f32 0.0, %v472
    %v474 = vpop.f32.mrf.mxu0
    %475 = vdwg.mxu0
    %476 = vmatpush.bf16.msra.mxu0 0
    %477 = vmatpush.bf16.msra.mxu0 0
    %478 = vmatpush.bf16.msra.mxu0 0
    %479 = vmatpush.bf16.msra.mxu0 0
    %480 = vmatpush.bf16.msra.mxu0 0
    %481 = vmatpush.bf16.msra.mxu0 0
    %482 = vmatpush.bf16.msra.mxu0 0
    %483 = vmatpush.bf16.msra.mxu0 %v296
    %484 = vmatmul.bf16.gmra.mxu0 %v422
    %v485 = vpop.f32.mrf.mxu0
    %v486 = vadd.f32 0.0, %v485
    %v487 = vpop.f32.mrf.mxu0
    %488 = vdwg.mxu0
    %489 = vmatpush.bf16.msra.mxu0 0
    %490 = vmatpush.bf16.msra.mxu0 0
    %491 = vmatpush.bf16.msra.mxu0 0
    %492 = vmatpush.bf16.msra.mxu0 0
    %493 = vmatpush.bf16.msra.mxu0 0
    %494 = vmatpush.bf16.msra.mxu0 0
    %495 = vmatpush.bf16.msra.mxu0 0
    %496 = vmatpush.bf16.msra.mxu0 %v297
    %497 = vmatmul.bf16.gmra.mxu0 %v422
    %v498 = vpop.f32.mrf.mxu0
    %v499 = vadd.f32 0.0, %v498
    %v500 = vpop.f32.mrf.mxu0
    %501 = vdwg.mxu0
    %502 = vmatpush.bf16.msra.mxu0 0
    %503 = vmatpush.bf16.msra.mxu0 0
    %504 = vmatpush.bf16.msra.mxu0 0
    %505 = vmatpush.bf16.msra.mxu0 0
    %506 = vmatpush.bf16.msra.mxu0 0
    %507 = vmatpush.bf16.msra.mxu0 0
    %508 = vmatpush.bf16.msra.mxu0 0
    %509 = vmatpush.bf16.msra.mxu0 %v298
    %510 = vmatmul.bf16.gmra.mxu0 %v422
    %v511 = vpop.f32.mrf.mxu0
    %v512 = vadd.f32 0.0, %v511
    %v513 = vpop.f32.mrf.mxu0
    %514 = vdwg.mxu0
    %515 = vmatpush.bf16.msra.mxu0 0
    %516 = vmatpush.bf16.msra.mxu0 0
    %517 = vmatpush.bf16.msra.mxu0 0
    %518 = vmatpush.bf16.msra.mxu0 0
    %519 = vmatpush.bf16.msra.mxu0 0
    %520 = vmatpush.bf16.msra.mxu0 0
    %521 = vmatpush.bf16.msra.mxu0 0
    %522 = vmatpush.bf16.msra.mxu0 %v299
    %523 = vmatmul.bf16.gmra.mxu0 %v422
    %v524 = vpop.f32.mrf.mxu0
    %v525 = vadd.f32 0.0, %v524
    %v526 = vpop.f32.mrf.mxu0
    %527 = vdwg.mxu0
    %528 = vmatpush.bf16.msra.mxu0 0
    %529 = vmatpush.bf16.msra.mxu0 0
    %530 = vmatpush.bf16.msra.mxu0 0
    %531 = vmatpush.bf16.msra.mxu0 0
    %532 = vmatpush.bf16.msra.mxu0 0
    %533 = vmatpush.bf16.msra.mxu0 0
    %534 = vmatpush.bf16.msra.mxu0 0
    %535 = vmatpush.bf16.msra.mxu0 %v300
    %536 = vmatmul.bf16.gmra.mxu0 %v422
    %v537 = vpop.f32.mrf.mxu0
    %v538 = vadd.f32 0.0, %v537
    %v539 = vpop.f32.mrf.mxu0
    %540 = vdwg.mxu0
    %541 = vmatpush.bf16.msra.mxu0 0
    %542 = vmatpush.bf16.msra.mxu0 0
    %543 = vmatpush.bf16.msra.mxu0 0
    %544 = vmatpush.bf16.msra.mxu0 0
    %545 = vmatpush.bf16.msra.mxu0 0
    %546 = vmatpush.bf16.msra.mxu0 0
    %547 = vmatpush.bf16.msra.mxu0 0
    %548 = vmatpush.bf16.msra.mxu0 %v301
    %549 = vmatmul.bf16.gmra.mxu0 %v422
    %v550 = vpop.f32.mrf.mxu0
    %v551 = vadd.f32 0.0, %v550
    %v552 = vpop.f32.mrf.mxu0
    %553 = vdwg.mxu0
    %554 = vmatpush.bf16.msra.mxu0 0
    %555 = vmatpush.bf16.msra.mxu0 0
    %556 = vmatpush.bf16.msra.mxu0 0
    %557 = vmatpush.bf16.msra.mxu0 0
    %558 = vmatpush.bf16.msra.mxu0 0
    %559 = vmatpush.bf16.msra.mxu0 0
    %560 = vmatpush.bf16.msra.mxu0 0
    %561 = vmatpush.bf16.msra.mxu0 %v302
    %562 = vmatmul.bf16.gmra.mxu0 %v422
    %v563 = vpop.f32.mrf.mxu0
    %v564 = vadd.f32 0.0, %v563
    %v565 = vpop.f32.mrf.mxu0
    %566 = vdwg.mxu0
    %567 = vmatpush.bf16.msra.mxu0 0
    %568 = vmatpush.bf16.msra.mxu0 0
    %569 = vmatpush.bf16.msra.mxu0 0
    %570 = vmatpush.bf16.msra.mxu0 0
    %571 = vmatpush.bf16.msra.mxu0 0
    %572 = vmatpush.bf16.msra.mxu0 0
    %573 = vmatpush.bf16.msra.mxu0 0
    %574 = vmatpush.bf16.msra.mxu0 %v303
    %575 = vmatmul.bf16.gmra.mxu0 %v422
    %v576 = vpop.f32.mrf.mxu0
    %v577 = vadd.f32 0.0, %v576
    %v578 = vpop.f32.mrf.mxu0
    %579 = vdwg.mxu0
    %580 = vmatpush.bf16.msra.mxu0 0
    %581 = vmatpush.bf16.msra.mxu0 0
    %582 = vmatpush.bf16.msra.mxu0 0
    %583 = vmatpush.bf16.msra.mxu0 0
    %584 = vmatpush.bf16.msra.mxu0 0
    %585 = vmatpush.bf16.msra.mxu0 0
    %586 = vmatpush.bf16.msra.mxu0 0
    %587 = vmatpush.bf16.msra.mxu0 %v304
    %588 = vmatmul.bf16.gmra.mxu0 %v422
    %v589 = vpop.f32.mrf.mxu0
    %v590 = vadd.f32 0.0, %v589
    %v591 = vpop.f32.mrf.mxu0
    %592 = vdwg.mxu0
    %593 = vmatpush.bf16.msra.mxu0 0
    %594 = vmatpush.bf16.msra.mxu0 0
    %595 = vmatpush.bf16.msra.mxu0 0
    %596 = vmatpush.bf16.msra.mxu0 0
    %597 = vmatpush.bf16.msra.mxu0 0
    %598 = vmatpush.bf16.msra.mxu0 0
    %599 = vmatpush.bf16.msra.mxu0 0
    %600 = vmatpush.bf16.msra.mxu0 %v305
    %601 = vmatmul.bf16.gmra.mxu0 %v422
    %v602 = vpop.f32.mrf.mxu0
    %v603 = vadd.f32 0.0, %v602
    %v604 = vpop.f32.mrf.mxu0
    %605 = vdwg.mxu0
    %606 = vmatpush.bf16.msra.mxu0 0
    %607 = vmatpush.bf16.msra.mxu0 0
    %608 = vmatpush.bf16.msra.mxu0 0
    %609 = vmatpush.bf16.msra.mxu0 0
    %610 = vmatpush.bf16.msra.mxu0 0
    %611 = vmatpush.bf16.msra.mxu0 0
    %612 = vmatpush.bf16.msra.mxu0 0
    %613 = vmatpush.bf16.msra.mxu0 %v306
    %614 = vmatmul.bf16.gmra.mxu0 %v422
    %v615 = vpop.f32.mrf.mxu0
    %v616 = vadd.f32 0.0, %v615
    %v617 = vpop.f32.mrf.mxu0
    %618 = vdwg.mxu0
    %619 = vmatpush.bf16.msra.mxu0 0
    %620 = vmatpush.bf16.msra.mxu0 0
    %621 = vmatpush.bf16.msra.mxu0 0
    %622 = vmatpush.bf16.msra.mxu0 0
    %623 = vmatpush.bf16.msra.mxu0 0
    %624 = vmatpush.bf16.msra.mxu0 0
    %625 = vmatpush.bf16.msra.mxu0 0
    %626 = vmatpush.bf16.msra.mxu0 %v307
    %627 = vmatmul.bf16.gmra.mxu0 %v422
    %v628 = vpop.f32.mrf.mxu0
    %v629 = vadd.f32 0.0, %v628
    %v630 = vpop.f32.mrf.mxu0
    %631 = vdwg.mxu0
    %632 = vmatpush.bf16.msra.mxu0 0
    %633 = vmatpush.bf16.msra.mxu0 0
    %634 = vmatpush.bf16.msra.mxu0 0
    %635 = vmatpush.bf16.msra.mxu0 0
    %636 = vmatpush.bf16.msra.mxu0 0
    %637 = vmatpush.bf16.msra.mxu0 0
    %638 = vmatpush.bf16.msra.mxu0 0
    %639 = vmatpush.bf16.msra.mxu0 %v308
    %640 = vmatmul.bf16.gmra.mxu0 %v422
    %v641 = vpop.f32.mrf.mxu0
    %v642 = vadd.f32 0.0, %v641
    %v643 = vpop.f32.mrf.mxu0
    %644 = vdwg.mxu0
    %645 = vmatpush.bf16.msra.mxu0 0
    %646 = vmatpush.bf16.msra.mxu0 0
    %647 = vmatpush.bf16.msra.mxu0 0
    %648 = vmatpush.bf16.msra.mxu0 0
    %649 = vmatpush.bf16.msra.mxu0 0
    %650 = vmatpush.bf16.msra.mxu0 0
    %651 = vmatpush.bf16.msra.mxu0 0
    %652 = vmatpush.bf16.msra.mxu0 %v309
    %653 = vmatmul.bf16.gmra.mxu0 %v422
    %v654 = vpop.f32.mrf.mxu0
    %v655 = vadd.f32 0.0, %v654
    %v656 = vpop.f32.mrf.mxu0
    %657 = vdwg.mxu0
    %658 = vmatpush.bf16.msra.mxu0 0
    %659 = vmatpush.bf16.msra.mxu0 0
    %660 = vmatpush.bf16.msra.mxu0 0
    %661 = vmatpush.bf16.msra.mxu0 0
    %662 = vmatpush.bf16.msra.mxu0 0
    %663 = vmatpush.bf16.msra.mxu0 0
    %664 = vmatpush.bf16.msra.mxu0 0
    %665 = vmatpush.bf16.msra.mxu0 %v310
    %666 = vmatmul.bf16.gmra.mxu0 %v422
    %v667 = vpop.f32.mrf.mxu0
    %v668 = vadd.f32 0.0, %v667
    %v669 = vpop.f32.mrf.mxu0
    %670 = vdwg.mxu0
    %671 = vmatpush.bf16.msra.mxu0 0
    %672 = vmatpush.bf16.msra.mxu0 0
    %673 = vmatpush.bf16.msra.mxu0 0
    %674 = vmatpush.bf16.msra.mxu0 0
    %675 = vmatpush.bf16.msra.mxu0 0
    %676 = vmatpush.bf16.msra.mxu0 0
    %677 = vmatpush.bf16.msra.mxu0 0
    %678 = vmatpush.bf16.msra.mxu0 %v311
    %679 = vmatmul.bf16.gmra.mxu0 %v422
    %v680 = vpop.f32.mrf.mxu0
    %v681 = vadd.f32 0.0, %v680
    %v682 = vpop.f32.mrf.mxu0
    %683 = vdwg.mxu0
    %684 = vmatpush.bf16.msra.mxu0 0
    %685 = vmatpush.bf16.msra.mxu0 0
    %686 = vmatpush.bf16.msra.mxu0 0
    %687 = vmatpush.bf16.msra.mxu0 0
    %688 = vmatpush.bf16.msra.mxu0 0
    %689 = vmatpush.bf16.msra.mxu0 0
    %690 = vmatpush.bf16.msra.mxu0 0
    %691 = vmatpush.bf16.msra.mxu0 %v312
    %692 = vmatmul.bf16.gmra.mxu0 %v422
    %v693 = vpop.f32.mrf.mxu0
    %v694 = vadd.f32 0.0, %v693
    %v695 = vpop.f32.mrf.mxu0
    %696 = vdwg.mxu0
    %697 = vmatpush.bf16.msra.mxu0 0
    %698 = vmatpush.bf16.msra.mxu0 0
    %699 = vmatpush.bf16.msra.mxu0 0
    %700 = vmatpush.bf16.msra.mxu0 0
    %701 = vmatpush.bf16.msra.mxu0 0
    %702 = vmatpush.bf16.msra.mxu0 0
    %703 = vmatpush.bf16.msra.mxu0 0
    %704 = vmatpush.bf16.msra.mxu0 %v313
    %705 = vmatmul.bf16.gmra.mxu0 %v422
    %v706 = vpop.f32.mrf.mxu0
    %v707 = vadd.f32 0.0, %v706
    %v708 = vpop.f32.mrf.mxu0
    %709 = vdwg.mxu0
    %710 = vmatpush.bf16.msra.mxu0 0
    %711 = vmatpush.bf16.msra.mxu0 0
    %712 = vmatpush.bf16.msra.mxu0 0
    %713 = vmatpush.bf16.msra.mxu0 0
    %714 = vmatpush.bf16.msra.mxu0 0
    %715 = vmatpush.bf16.msra.mxu0 0
    %716 = vmatpush.bf16.msra.mxu0 0
    %717 = vmatpush.bf16.msra.mxu0 %v314
    %718 = vmatmul.bf16.gmra.mxu0 %v422
    %v719 = vpop.f32.mrf.mxu0
    %v720 = vadd.f32 0.0, %v719
    %v721 = vpop.f32.mrf.mxu0
    %722 = vdwg.mxu0
    %723 = vmatpush.bf16.msra.mxu0 0
    %724 = vmatpush.bf16.msra.mxu0 0
    %725 = vmatpush.bf16.msra.mxu0 0
    %726 = vmatpush.bf16.msra.mxu0 0
    %727 = vmatpush.bf16.msra.mxu0 0
    %728 = vmatpush.bf16.msra.mxu0 0
    %729 = vmatpush.bf16.msra.mxu0 0
    %730 = vmatpush.bf16.msra.mxu0 %v315
    %731 = vmatmul.bf16.gmra.mxu0 %v422
    %v732 = vpop.f32.mrf.mxu0
    %v733 = vadd.f32 0.0, %v732
    %v734 = vpop.f32.mrf.mxu0
    %735 = vdwg.mxu0
    %736 = vmatpush.bf16.msra.mxu0 0
    %737 = vmatpush.bf16.msra.mxu0 0
    %738 = vmatpush.bf16.msra.mxu0 0
    %739 = vmatpush.bf16.msra.mxu0 0
    %740 = vmatpush.bf16.msra.mxu0 0
    %741 = vmatpush.bf16.msra.mxu0 0
    %742 = vmatpush.bf16.msra.mxu0 0
    %743 = vmatpush.bf16.msra.mxu0 %v316
    %744 = vmatmul.bf16.gmra.mxu0 %v422
    %v745 = vpop.f32.mrf.mxu0
    %v746 = vadd.f32 0.0, %v745
    %v747 = vpop.f32.mrf.mxu0
    %748 = vdwg.mxu0
    %749 = vmatpush.bf16.msra.mxu0 0
    %750 = vmatpush.bf16.msra.mxu0 0
    %751 = vmatpush.bf16.msra.mxu0 0
    %752 = vmatpush.bf16.msra.mxu0 0
    %753 = vmatpush.bf16.msra.mxu0 0
    %754 = vmatpush.bf16.msra.mxu0 0
    %755 = vmatpush.bf16.msra.mxu0 0
    %756 = vmatpush.bf16.msra.mxu0 %v317
    %757 = vmatmul.bf16.gmra.mxu0 %v422
    %v758 = vpop.f32.mrf.mxu0
    %v759 = vadd.f32 0.0, %v758
    %v760 = vpop.f32.mrf.mxu0
    %761 = vdwg.mxu0
    %762 = vmatpush.bf16.msra.mxu0 0
    %763 = vmatpush.bf16.msra.mxu0 0
    %764 = vmatpush.bf16.msra.mxu0 0
    %765 = vmatpush.bf16.msra.mxu0 0
    %766 = vmatpush.bf16.msra.mxu0 0
    %767 = vmatpush.bf16.msra.mxu0 0
    %768 = vmatpush.bf16.msra.mxu0 0
    %769 = vmatpush.bf16.msra.mxu0 %v318
    %770 = vmatmul.bf16.gmra.mxu0 %v422
    %v771 = vpop.f32.mrf.mxu0
    %v772 = vadd.f32 0.0, %v771
    %v773 = vpop.f32.mrf.mxu0
    %774 = vdwg.mxu0
    %775 = vmatpush.bf16.msra.mxu0 0
    %776 = vmatpush.bf16.msra.mxu0 0
    %777 = vmatpush.bf16.msra.mxu0 0
    %778 = vmatpush.bf16.msra.mxu0 0
    %779 = vmatpush.bf16.msra.mxu0 0
    %780 = vmatpush.bf16.msra.mxu0 0
    %781 = vmatpush.bf16.msra.mxu0 0
    %782 = vmatpush.bf16.msra.mxu0 %v319
    %783 = vmatmul.bf16.gmra.mxu0 %v422
    %v784 = vpop.f32.mrf.mxu0
    %v785 = vadd.f32 0.0, %v784
    %v786 = vpop.f32.mrf.mxu0
    %787 = vdwg.mxu0
    %788 = vmatpush.bf16.msra.mxu0 0
    %789 = vmatpush.bf16.msra.mxu0 0
    %790 = vmatpush.bf16.msra.mxu0 0
    %791 = vmatpush.bf16.msra.mxu0 0
    %792 = vmatpush.bf16.msra.mxu0 0
    %793 = vmatpush.bf16.msra.mxu0 0
    %794 = vmatpush.bf16.msra.mxu0 0
    %795 = vmatpush.bf16.msra.mxu0 %v320
    %796 = vmatmul.bf16.gmra.mxu0 %v422
    %v797 = vpop.f32.mrf.mxu0
    %v798 = vadd.f32 0.0, %v797
    %v799 = vpop.f32.mrf.mxu0
    %800 = vdwg.mxu0
    %801 = vmatpush.bf16.msra.mxu0 0
    %802 = vmatpush.bf16.msra.mxu0 0
    %803 = vmatpush.bf16.msra.mxu0 0
    %804 = vmatpush.bf16.msra.mxu0 0
    %805 = vmatpush.bf16.msra.mxu0 0
    %806 = vmatpush.bf16.msra.mxu0 0
    %807 = vmatpush.bf16.msra.mxu0 0
    %808 = vmatpush.bf16.msra.mxu0 %v321
    %809 = vmatmul.bf16.gmra.mxu0 %v422
    %v810 = vpop.f32.mrf.mxu0
    %v811 = vadd.f32 0.0, %v810
    %v812 = vpop.f32.mrf.mxu0
    %813 = vdwg.mxu0
    %814 = vmatpush.bf16.msra.mxu0 0
    %815 = vmatpush.bf16.msra.mxu0 0
    %816 = vmatpush.bf16.msra.mxu0 0
    %817 = vmatpush.bf16.msra.mxu0 0
    %818 = vmatpush.bf16.msra.mxu0 0
    %819 = vmatpush.bf16.msra.mxu0 0
    %820 = vmatpush.bf16.msra.mxu0 0
    %821 = vmatpush.bf16.msra.mxu0 %v322
    %822 = vmatmul.bf16.gmra.mxu0 %v422
    %v823 = vpop.f32.mrf.mxu0
    %v824 = vadd.f32 0.0, %v823
    %v825 = vpop.f32.mrf.mxu0
    %826 = vdwg.mxu0
    %827 = vmatpush.bf16.msra.mxu0 0
    %828 = vmatpush.bf16.msra.mxu0 0
    %829 = vmatpush.bf16.msra.mxu0 0
    %830 = vmatpush.bf16.msra.mxu0 0
    %831 = vmatpush.bf16.msra.mxu0 0
    %832 = vmatpush.bf16.msra.mxu0 0
    %833 = vmatpush.bf16.msra.mxu0 0
    %834 = vmatpush.bf16.msra.mxu0 %v323
    %835 = vmatmul.bf16.gmra.mxu0 %v422
    %v836 = vpop.f32.mrf.mxu0
    %v837 = vadd.f32 0.0, %v836
    %v838 = vpop.f32.mrf.mxu0
    %839 = vdwg.mxu0
    %840 = vmatpush.bf16.msra.mxu0 0
    %841 = vmatpush.bf16.msra.mxu0 0
    %842 = vmatpush.bf16.msra.mxu0 0
    %843 = vmatpush.bf16.msra.mxu0 0
    %844 = vmatpush.bf16.msra.mxu0 0
    %845 = vmatpush.bf16.msra.mxu0 0
    %846 = vmatpush.bf16.msra.mxu0 0
    %847 = vmatpush.bf16.msra.mxu0 %v324
    %848 = vmatmul.bf16.gmra.mxu0 %v422
    %v849 = vpop.f32.mrf.mxu0
    %v850 = vadd.f32 0.0, %v849
    %v851 = vpop.f32.mrf.mxu0
    %852 = vdwg.mxu0
    %853 = vmatpush.bf16.msra.mxu0 0
    %854 = vmatpush.bf16.msra.mxu0 0
    %855 = vmatpush.bf16.msra.mxu0 0
    %856 = vmatpush.bf16.msra.mxu0 0
    %857 = vmatpush.bf16.msra.mxu0 0
    %858 = vmatpush.bf16.msra.mxu0 0
    %859 = vmatpush.bf16.msra.mxu0 0
    %860 = vmatpush.bf16.msra.mxu0 %v325
    %861 = vmatmul.bf16.gmra.mxu0 %v422
    %v862 = vpop.f32.mrf.mxu0
    %v863 = vadd.f32 0.0, %v862
    %v864 = vpop.f32.mrf.mxu0
    %865 = vdwg.mxu0
    %866 = vmatpush.bf16.msra.mxu0 0
    %867 = vmatpush.bf16.msra.mxu0 0
    %868 = vmatpush.bf16.msra.mxu0 0
    %869 = vmatpush.bf16.msra.mxu0 0
    %870 = vmatpush.bf16.msra.mxu0 0
    %871 = vmatpush.bf16.msra.mxu0 0
    %872 = vmatpush.bf16.msra.mxu0 0
    %873 = vmatpush.bf16.msra.mxu0 %v326
    %874 = vmatmul.bf16.gmra.mxu0 %v422
    %v875 = vpop.f32.mrf.mxu0
    %v876 = vadd.f32 0.0, %v875
    %v877 = vpop.f32.mrf.mxu0
    %878 = vdwg.mxu0
    %879 = vmatpush.bf16.msra.mxu0 0
    %880 = vmatpush.bf16.msra.mxu0 0
    %881 = vmatpush.bf16.msra.mxu0 0
    %882 = vmatpush.bf16.msra.mxu0 0
    %883 = vmatpush.bf16.msra.mxu0 0
    %884 = vmatpush.bf16.msra.mxu0 0
    %885 = vmatpush.bf16.msra.mxu0 0
    %886 = vmatpush.bf16.msra.mxu0 %v327
    %887 = vmatmul.bf16.gmra.mxu0 %v422
    %v888 = vpop.f32.mrf.mxu0
    %v889 = vadd.f32 0.0, %v888
    %v890 = vpop.f32.mrf.mxu0
    %891 = vdwg.mxu0
    %892 = vmatpush.bf16.msra.mxu0 0
    %893 = vmatpush.bf16.msra.mxu0 0
    %894 = vmatpush.bf16.msra.mxu0 0
    %895 = vmatpush.bf16.msra.mxu0 0
    %896 = vmatpush.bf16.msra.mxu0 0
    %897 = vmatpush.bf16.msra.mxu0 0
    %898 = vmatpush.bf16.msra.mxu0 0
    %899 = vmatpush.bf16.msra.mxu0 %v328
    %900 = vmatmul.bf16.gmra.mxu0 %v422
    %v901 = vpop.f32.mrf.mxu0
    %v902 = vadd.f32 0.0, %v901
    %v903 = vpop.f32.mrf.mxu0
    %904 = vdwg.mxu0
    %905 = vmatpush.bf16.msra.mxu0 0
    %906 = vmatpush.bf16.msra.mxu0 0
    %907 = vmatpush.bf16.msra.mxu0 0
    %908 = vmatpush.bf16.msra.mxu0 0
    %909 = vmatpush.bf16.msra.mxu0 0
    %910 = vmatpush.bf16.msra.mxu0 0
    %911 = vmatpush.bf16.msra.mxu0 0
    %912 = vmatpush.bf16.msra.mxu0 %v329
    %913 = vmatmul.bf16.gmra.mxu0 %v422
    %v914 = vpop.f32.mrf.mxu0
    %v915 = vadd.f32 0.0, %v914
    %v916 = vpop.f32.mrf.mxu0
    %917 = vdwg.mxu0
    %918 = vmatpush.bf16.msra.mxu0 0
    %919 = vmatpush.bf16.msra.mxu0 0
    %920 = vmatpush.bf16.msra.mxu0 0
    %921 = vmatpush.bf16.msra.mxu0 0
    %922 = vmatpush.bf16.msra.mxu0 0
    %923 = vmatpush.bf16.msra.mxu0 0
    %924 = vmatpush.bf16.msra.mxu0 0
    %925 = vmatpush.bf16.msra.mxu0 %v330
    %926 = vmatmul.bf16.gmra.mxu0 %v422
    %v927 = vpop.f32.mrf.mxu0
    %v928 = vadd.f32 0.0, %v927
    %v929 = vpop.f32.mrf.mxu0
    %930 = vdwg.mxu0
    %931 = vmatpush.bf16.msra.mxu0 0
    %932 = vmatpush.bf16.msra.mxu0 0
    %933 = vmatpush.bf16.msra.mxu0 0
    %934 = vmatpush.bf16.msra.mxu0 0
    %935 = vmatpush.bf16.msra.mxu0 0
    %936 = vmatpush.bf16.msra.mxu0 0
    %937 = vmatpush.bf16.msra.mxu0 0
    %938 = vmatpush.bf16.msra.mxu0 %v331
    %939 = vmatmul.bf16.gmra.mxu0 %v422
    %v940 = vpop.f32.mrf.mxu0
    %v941 = vadd.f32 0.0, %v940
    %v942 = vpop.f32.mrf.mxu0
    %943 = vdwg.mxu0
    %944 = vmatpush.bf16.msra.mxu0 0
    %945 = vmatpush.bf16.msra.mxu0 0
    %946 = vmatpush.bf16.msra.mxu0 0
    %947 = vmatpush.bf16.msra.mxu0 0
    %948 = vmatpush.bf16.msra.mxu0 0
    %949 = vmatpush.bf16.msra.mxu0 0
    %950 = vmatpush.bf16.msra.mxu0 0
    %951 = vmatpush.bf16.msra.mxu0 %v332
    %952 = vmatmul.bf16.gmra.mxu0 %v422
    %v953 = vpop.f32.mrf.mxu0
    %v954 = vadd.f32 0.0, %v953
    %v955 = vpop.f32.mrf.mxu0
    %956 = vdwg.mxu0
    %957 = vmatpush.bf16.msra.mxu0 0
    %958 = vmatpush.bf16.msra.mxu0 0
    %959 = vmatpush.bf16.msra.mxu0 0
    %960 = vmatpush.bf16.msra.mxu0 0
    %961 = vmatpush.bf16.msra.mxu0 0
    %962 = vmatpush.bf16.msra.mxu0 0
    %963 = vmatpush.bf16.msra.mxu0 0
    %964 = vmatpush.bf16.msra.mxu0 %v333
    %965 = vmatmul.bf16.gmra.mxu0 %v422
    %v966 = vpop.f32.mrf.mxu0
    %v967 = vadd.f32 0.0, %v966
    %v968 = vpop.f32.mrf.mxu0
    %969 = vdwg.mxu0
    %970 = vmatpush.bf16.msra.mxu0 0
    %971 = vmatpush.bf16.msra.mxu0 0
    %972 = vmatpush.bf16.msra.mxu0 0
    %973 = vmatpush.bf16.msra.mxu0 0
    %974 = vmatpush.bf16.msra.mxu0 0
    %975 = vmatpush.bf16.msra.mxu0 0
    %976 = vmatpush.bf16.msra.mxu0 0
    %977 = vmatpush.bf16.msra.mxu0 %v334
    %978 = vmatmul.bf16.gmra.mxu0 %v422
    %v979 = vpop.f32.mrf.mxu0
    %v980 = vadd.f32 0.0, %v979
    %v981 = vpop.f32.mrf.mxu0
    %982 = vdwg.mxu0
    %983 = vmatpush.bf16.msra.mxu0 0
    %984 = vmatpush.bf16.msra.mxu0 0
    %985 = vmatpush.bf16.msra.mxu0 0
    %986 = vmatpush.bf16.msra.mxu0 0
    %987 = vmatpush.bf16.msra.mxu0 0
    %988 = vmatpush.bf16.msra.mxu0 0
    %989 = vmatpush.bf16.msra.mxu0 0
    %990 = vmatpush.bf16.msra.mxu0 %v335
    %991 = vmatmul.bf16.gmra.mxu0 %v422
    %v992 = vpop.f32.mrf.mxu0
    %v993 = vadd.f32 0.0, %v992
    %v994 = vpop.f32.mrf.mxu0
    %995 = vdwg.mxu0
    %996 = vmatpush.bf16.msra.mxu0 0
    %997 = vmatpush.bf16.msra.mxu0 0
    %998 = vmatpush.bf16.msra.mxu0 0
    %999 = vmatpush.bf16.msra.mxu0 0
    %1000 = vmatpush.bf16.msra.mxu0 0
    %1001 = vmatpush.bf16.msra.mxu0 0
    %1002 = vmatpush.bf16.msra.mxu0 0
    %1003 = vmatpush.bf16.msra.mxu0 %v336
    %1004 = vmatmul.bf16.gmra.mxu0 %v422
    %v1005 = vpop.f32.mrf.mxu0
    %v1006 = vadd.f32 0.0, %v1005
    %v1007 = vpop.f32.mrf.mxu0
    %1008 = vdwg.mxu0
    %1009 = vmatpush.bf16.msra.mxu0 0
    %1010 = vmatpush.bf16.msra.mxu0 0
    %1011 = vmatpush.bf16.msra.mxu0 0
    %1012 = vmatpush.bf16.msra.mxu0 0
    %1013 = vmatpush.bf16.msra.mxu0 0
    %1014 = vmatpush.bf16.msra.mxu0 0
    %1015 = vmatpush.bf16.msra.mxu0 0
    %1016 = vmatpush.bf16.msra.mxu0 %v337
    %1017 = vmatmul.bf16.gmra.mxu0 %v422
    %v1018 = vpop.f32.mrf.mxu0
    %v1019 = vadd.f32 0.0, %v1018
    %v1020 = vpop.f32.mrf.mxu0
    %1021 = vdwg.mxu0
    %1022 = vmatpush.bf16.msra.mxu0 0
    %1023 = vmatpush.bf16.msra.mxu0 0
    %1024 = vmatpush.bf16.msra.mxu0 0
    %1025 = vmatpush.bf16.msra.mxu0 0
    %1026 = vmatpush.bf16.msra.mxu0 0
    %1027 = vmatpush.bf16.msra.mxu0 0
    %1028 = vmatpush.bf16.msra.mxu0 0
    %1029 = vmatpush.bf16.msra.mxu0 %v338
    %1030 = vmatmul.bf16.gmra.mxu0 %v422
    %v1031 = vpop.f32.mrf.mxu0
    %v1032 = vadd.f32 0.0, %v1031
    %v1033 = vpop.f32.mrf.mxu0
    %1034 = vdwg.mxu0
    %1035 = vmatpush.bf16.msra.mxu0 0
    %1036 = vmatpush.bf16.msra.mxu0 0
    %1037 = vmatpush.bf16.msra.mxu0 0
    %1038 = vmatpush.bf16.msra.mxu0 0
    %1039 = vmatpush.bf16.msra.mxu0 0
    %1040 = vmatpush.bf16.msra.mxu0 0
    %1041 = vmatpush.bf16.msra.mxu0 0
    %1042 = vmatpush.bf16.msra.mxu0 %v339
    %1043 = vmatmul.bf16.gmra.mxu0 %v422
    %v1044 = vpop.f32.mrf.mxu0
    %v1045 = vadd.f32 0.0, %v1044
    %v1046 = vpop.f32.mrf.mxu0
    %1047 = vdwg.mxu0
    %1048 = vmatpush.bf16.msra.mxu0 0
    %1049 = vmatpush.bf16.msra.mxu0 0
    %1050 = vmatpush.bf16.msra.mxu0 0
    %1051 = vmatpush.bf16.msra.mxu0 0
    %1052 = vmatpush.bf16.msra.mxu0 0
    %1053 = vmatpush.bf16.msra.mxu0 0
    %1054 = vmatpush.bf16.msra.mxu0 0
    %1055 = vmatpush.bf16.msra.mxu0 %v340
    %1056 = vmatmul.bf16.gmra.mxu0 %v422
    %v1057 = vpop.f32.mrf.mxu0
    %v1058 = vadd.f32 0.0, %v1057
    %v1059 = vpop.f32.mrf.mxu0
    %1060 = vdwg.mxu0
    %1061 = vmatpush.bf16.msra.mxu0 0
    %1062 = vmatpush.bf16.msra.mxu0 0
    %1063 = vmatpush.bf16.msra.mxu0 0
    %1064 = vmatpush.bf16.msra.mxu0 0
    %1065 = vmatpush.bf16.msra.mxu0 0
    %1066 = vmatpush.bf16.msra.mxu0 0
    %1067 = vmatpush.bf16.msra.mxu0 0
    %1068 = vmatpush.bf16.msra.mxu0 %v341
    %1069 = vmatmul.bf16.gmra.mxu0 %v422
    %v1070 = vpop.f32.mrf.mxu0
    %v1071 = vadd.f32 0.0, %v1070
    %v1072 = vpop.f32.mrf.mxu0
    %1073 = vdwg.mxu0
    %1074 = vmatpush.bf16.msra.mxu0 0
    %1075 = vmatpush.bf16.msra.mxu0 0
    %1076 = vmatpush.bf16.msra.mxu0 0
    %1077 = vmatpush.bf16.msra.mxu0 0
    %1078 = vmatpush.bf16.msra.mxu0 0
    %1079 = vmatpush.bf16.msra.mxu0 0
    %1080 = vmatpush.bf16.msra.mxu0 0
    %1081 = vmatpush.bf16.msra.mxu0 %v342
    %1082 = vmatmul.bf16.gmra.mxu0 %v422
    %v1083 = vpop.f32.mrf.mxu0
    %v1084 = vadd.f32 0.0, %v1083
    %v1085 = vpop.f32.mrf.mxu0
    %1086 = vdwg.mxu0
    %1087 = vmatpush.bf16.msra.mxu0 0
    %1088 = vmatpush.bf16.msra.mxu0 0
    %1089 = vmatpush.bf16.msra.mxu0 0
    %1090 = vmatpush.bf16.msra.mxu0 0
    %1091 = vmatpush.bf16.msra.mxu0 0
    %1092 = vmatpush.bf16.msra.mxu0 0
    %1093 = vmatpush.bf16.msra.mxu0 0
    %1094 = vmatpush.bf16.msra.mxu0 %v343
    %1095 = vmatmul.bf16.gmra.mxu0 %v422
    %v1096 = vpop.f32.mrf.mxu0
    %v1097 = vadd.f32 0.0, %v1096
    %v1098 = vpop.f32.mrf.mxu0
    %1099 = vdwg.mxu0
    %1100 = vmatpush.bf16.msra.mxu0 0
    %1101 = vmatpush.bf16.msra.mxu0 0
    %1102 = vmatpush.bf16.msra.mxu0 0
    %1103 = vmatpush.bf16.msra.mxu0 0
    %1104 = vmatpush.bf16.msra.mxu0 0
    %1105 = vmatpush.bf16.msra.mxu0 0
    %1106 = vmatpush.bf16.msra.mxu0 0
    %1107 = vmatpush.bf16.msra.mxu0 %v344
    %1108 = vmatmul.bf16.gmra.mxu0 %v422
    %v1109 = vpop.f32.mrf.mxu0
    %v1110 = vadd.f32 0.0, %v1109
    %v1111 = vpop.f32.mrf.mxu0
    %1112 = vdwg.mxu0
    %1113 = vmatpush.bf16.msra.mxu0 0
    %1114 = vmatpush.bf16.msra.mxu0 0
    %1115 = vmatpush.bf16.msra.mxu0 0
    %1116 = vmatpush.bf16.msra.mxu0 0
    %1117 = vmatpush.bf16.msra.mxu0 0
    %1118 = vmatpush.bf16.msra.mxu0 0
    %1119 = vmatpush.bf16.msra.mxu0 0
    %1120 = vmatpush.bf16.msra.mxu0 %v345
    %1121 = vmatmul.bf16.gmra.mxu0 %v422
    %v1122 = vpop.f32.mrf.mxu0
    %v1123 = vadd.f32 0.0, %v1122
    %v1124 = vpop.f32.mrf.mxu0
    %1125 = vdwg.mxu0
    %1126 = vmatpush.bf16.msra.mxu0 0
    %1127 = vmatpush.bf16.msra.mxu0 0
    %1128 = vmatpush.bf16.msra.mxu0 0
    %1129 = vmatpush.bf16.msra.mxu0 0
    %1130 = vmatpush.bf16.msra.mxu0 0
    %1131 = vmatpush.bf16.msra.mxu0 0
    %1132 = vmatpush.bf16.msra.mxu0 0
    %1133 = vmatpush.bf16.msra.mxu0 %v346
    %1134 = vmatmul.bf16.gmra.mxu0 %v422
    %v1135 = vpop.f32.mrf.mxu0
    %v1136 = vadd.f32 0.0, %v1135
    %v1137 = vpop.f32.mrf.mxu0
    %1138 = vdwg.mxu0
    %1139 = vmatpush.bf16.msra.mxu0 0
    %1140 = vmatpush.bf16.msra.mxu0 0
    %1141 = vmatpush.bf16.msra.mxu0 0
    %1142 = vmatpush.bf16.msra.mxu0 0
    %1143 = vmatpush.bf16.msra.mxu0 0
    %1144 = vmatpush.bf16.msra.mxu0 0
    %1145 = vmatpush.bf16.msra.mxu0 0
    %1146 = vmatpush.bf16.msra.mxu0 %v347
    %1147 = vmatmul.bf16.gmra.mxu0 %v422
    %v1148 = vpop.f32.mrf.mxu0
    %v1149 = vadd.f32 0.0, %v1148
    %v1150 = vpop.f32.mrf.mxu0
    %1151 = vdwg.mxu0
    %1152 = vmatpush.bf16.msra.mxu0 0
    %1153 = vmatpush.bf16.msra.mxu0 0
    %1154 = vmatpush.bf16.msra.mxu0 0
    %1155 = vmatpush.bf16.msra.mxu0 0
    %1156 = vmatpush.bf16.msra.mxu0 0
    %1157 = vmatpush.bf16.msra.mxu0 0
    %1158 = vmatpush.bf16.msra.mxu0 0
    %1159 = vmatpush.bf16.msra.mxu0 %v348
    %1160 = vmatmul.bf16.gmra.mxu0 %v422
    %v1161 = vpop.f32.mrf.mxu0
    %v1162 = vadd.f32 0.0, %v1161
    %v1163 = vpop.f32.mrf.mxu0
    %1164 = vdwg.mxu0
    %1165 = vmatpush.bf16.msra.mxu0 0
    %1166 = vmatpush.bf16.msra.mxu0 0
    %1167 = vmatpush.bf16.msra.mxu0 0
    %1168 = vmatpush.bf16.msra.mxu0 0
    %1169 = vmatpush.bf16.msra.mxu0 0
    %1170 = vmatpush.bf16.msra.mxu0 0
    %1171 = vmatpush.bf16.msra.mxu0 0
    %1172 = vmatpush.bf16.msra.mxu0 %v349
    %1173 = vmatmul.bf16.gmra.mxu0 %v422
    %v1174 = vpop.f32.mrf.mxu0
    %v1175 = vadd.f32 0.0, %v1174
    %v1176 = vpop.f32.mrf.mxu0
    %1177 = vdwg.mxu0
    %1178 = vmatpush.bf16.msra.mxu0 0
    %1179 = vmatpush.bf16.msra.mxu0 0
    %1180 = vmatpush.bf16.msra.mxu0 0
    %1181 = vmatpush.bf16.msra.mxu0 0
    %1182 = vmatpush.bf16.msra.mxu0 0
    %1183 = vmatpush.bf16.msra.mxu0 0
    %1184 = vmatpush.bf16.msra.mxu0 0
    %1185 = vmatpush.bf16.msra.mxu0 %v350
    %1186 = vmatmul.bf16.gmra.mxu0 %v422
    %v1187 = vpop.f32.mrf.mxu0
    %v1188 = vadd.f32 0.0, %v1187
    %v1189 = vpop.f32.mrf.mxu0
    %1190 = vdwg.mxu0
    %1191 = vmatpush.bf16.msra.mxu0 0
    %1192 = vmatpush.bf16.msra.mxu0 0
    %1193 = vmatpush.bf16.msra.mxu0 0
    %1194 = vmatpush.bf16.msra.mxu0 0
    %1195 = vmatpush.bf16.msra.mxu0 0
    %1196 = vmatpush.bf16.msra.mxu0 0
    %1197 = vmatpush.bf16.msra.mxu0 0
    %1198 = vmatpush.bf16.msra.mxu0 %v351
    %1199 = vmatmul.bf16.gmra.mxu0 %v422
    %v1200 = vpop.f32.mrf.mxu0
    %v1201 = vadd.f32 0.0, %v1200
    %v1202 = vpop.f32.mrf.mxu0
    %1203 = vdwg.mxu0
    %1204 = vmatpush.bf16.msra.mxu0 0
    %1205 = vmatpush.bf16.msra.mxu0 0
    %1206 = vmatpush.bf16.msra.mxu0 0
    %1207 = vmatpush.bf16.msra.mxu0 0
    %1208 = vmatpush.bf16.msra.mxu0 0
    %1209 = vmatpush.bf16.msra.mxu0 0
    %1210 = vmatpush.bf16.msra.mxu0 0
    %1211 = vmatpush.bf16.msra.mxu0 %v352
    %1212 = vmatmul.bf16.gmra.mxu0 %v422
    %v1213 = vpop.f32.mrf.mxu0
    %v1214 = vadd.f32 0.0, %v1213
    %v1215 = vpop.f32.mrf.mxu0
    %1216 = vdwg.mxu0
    %1217 = vmatpush.bf16.msra.mxu0 0
    %1218 = vmatpush.bf16.msra.mxu0 0
    %1219 = vmatpush.bf16.msra.mxu0 0
    %1220 = vmatpush.bf16.msra.mxu0 0
    %1221 = vmatpush.bf16.msra.mxu0 0
    %1222 = vmatpush.bf16.msra.mxu0 0
    %1223 = vmatpush.bf16.msra.mxu0 0
    %1224 = vmatpush.bf16.msra.mxu0 %v353
    %1225 = vmatmul.bf16.gmra.mxu0 %v422
    %v1226 = vpop.f32.mrf.mxu0
    %v1227 = vadd.f32 0.0, %v1226
    %v1228 = vpop.f32.mrf.mxu0
    %1229 = vdwg.mxu0
    %1230 = vmatpush.bf16.msra.mxu0 0
    %1231 = vmatpush.bf16.msra.mxu0 0
    %1232 = vmatpush.bf16.msra.mxu0 0
    %1233 = vmatpush.bf16.msra.mxu0 0
    %1234 = vmatpush.bf16.msra.mxu0 0
    %1235 = vmatpush.bf16.msra.mxu0 0
    %1236 = vmatpush.bf16.msra.mxu0 0
    %1237 = vmatpush.bf16.msra.mxu0 %v354
    %1238 = vmatmul.bf16.gmra.mxu0 %v422
    %v1239 = vpop.f32.mrf.mxu0
    %v1240 = vadd.f32 0.0, %v1239
    %v1241 = vpop.f32.mrf.mxu0
    %1242 = vdwg.mxu0
    %1243 = vmatpush.bf16.msra.mxu0 0
    %1244 = vmatpush.bf16.msra.mxu0 0
    %1245 = vmatpush.bf16.msra.mxu0 0
    %1246 = vmatpush.bf16.msra.mxu0 0
    %1247 = vmatpush.bf16.msra.mxu0 0
    %1248 = vmatpush.bf16.msra.mxu0 0
    %1249 = vmatpush.bf16.msra.mxu0 0
    %1250 = vmatpush.bf16.msra.mxu0 %v355
    %1251 = vmatmul.bf16.gmra.mxu0 %v422
    %v1252 = vpop.f32.mrf.mxu0
    %v1253 = vadd.f32 0.0, %v1252
    %v1254 = vpop.f32.mrf.mxu0
    %1255 = vdwg.mxu0
    %1256 = vst [vmem:[%s3 + $0x10] sm:$0xff] %v434
    %1257 = vst [vmem:[%s3 + $0x18] sm:$0xff] %v447
    %1258 = vst [vmem:[%s3 + $0x20] sm:$0xff] %v460
    %1259 = vst [vmem:[%s3 + $0x28] sm:$0xff] %v473
    %1260 = vst [vmem:[%s3 + $0x30] sm:$0xff] %v486
    %1261 = vst [vmem:[%s3 + $0x38] sm:$0xff] %v499
    %1262 = vst [vmem:[%s3 + $0x40] sm:$0xff] %v512
    %1263 = vst [vmem:[%s3 + $0x48] sm:$0xff] %v525
    %1264 = vst [vmem:[%s3 + $0x50] sm:$0xff] %v538
    %1265 = vst [vmem:[%s3 + $0x58] sm:$0xff] %v551
    %1266 = vst [vmem:[%s3 + $0x60] sm:$0xff] %v564
    %1267 = vst [vmem:[%s3 + $0x68] sm:$0xff] %v577
    %1268 = vst [vmem:[%s3 + $0x70] sm:$0xff] %v590
    %1269 = vst [vmem:[%s3 + $0x78] sm:$0xff] %v603
    %1270 = vst [vmem:[%s3 + $0x80] sm:$0xff] %v616
    %1271 = vst [vmem:[%s3 + $0x88] sm:$0xff] %v629
    %1272 = vst [vmem:[%s3 + $0x90] sm:$0xff] %v642
    %1273 = vst [vmem:[%s3 + $0x98] sm:$0xff] %v655
    %1274 = vst [vmem:[%s3 + $0xa0] sm:$0xff] %v668
    %1275 = vst [vmem:[%s3 + $0xa8] sm:$0xff] %v681
    %1276 = vst [vmem:[%s3 + $0xb0] sm:$0xff] %v694
    %1277 = vst [vmem:[%s3 + $0xb8] sm:$0xff] %v707
    %1278 = vst [vmem:[%s3 + $0xc0] sm:$0xff] %v720
    %1279 = vst [vmem:[%s3 + $0xc8] sm:$0xff] %v733
    %1280 = vst [vmem:[%s3 + $0xd0] sm:$0xff] %v746
    %1281 = vst [vmem:[%s3 + $0xd8] sm:$0xff] %v759
    %1282 = vst [vmem:[%s3 + $0xe0] sm:$0xff] %v772
    %1283 = vst [vmem:[%s3 + $0xe8] sm:$0xff] %v785
    %1284 = vst [vmem:[%s3 + $0xf0] sm:$0xff] %v798
    %1285 = vst [vmem:[%s3 + $0xf8] sm:$0xff] %v811
    %1286 = vst [vmem:[%s3 + $0x100] sm:$0xff] %v824
    %1287 = vst [vmem:[%s3 + $0x108] sm:$0xff] %v837
    %1288 = vst [vmem:[%s3 + $0x110] sm:$0xff] %v850
    %1289 = vst [vmem:[%s3 + $0x118] sm:$0xff] %v863
    %1290 = vst [vmem:[%s3 + $0x120] sm:$0xff] %v876
    %1291 = vst [vmem:[%s3 + $0x128] sm:$0xff] %v889
    %1292 = vst [vmem:[%s3 + $0x130] sm:$0xff] %v902
    %1293 = vst [vmem:[%s3 + $0x138] sm:$0xff] %v915
    %1294 = vst [vmem:[%s3 + $0x140] sm:$0xff] %v928
    %1295 = vst [vmem:[%s3 + $0x148] sm:$0xff] %v941
    %1296 = vst [vmem:[%s3 + $0x150] sm:$0xff] %v954
    %1297 = vst [vmem:[%s3 + $0x158] sm:$0xff] %v967
    %1298 = vst [vmem:[%s3 + $0x160] sm:$0xff] %v980
    %1299 = vst [vmem:[%s3 + $0x168] sm:$0xff] %v993
    %1300 = vst [vmem:[%s3 + $0x170] sm:$0xff] %v1006
    %1301 = vst [vmem:[%s3 + $0x178] sm:$0xff] %v1019
    %1302 = vst [vmem:[%s3 + $0x180] sm:$0xff] %v1032
    %1303 = vst [vmem:[%s3 + $0x188] sm:$0xff] %v1045
    %1304 = vst [vmem:[%s3 + $0x190] sm:$0xff] %v1058
    %1305 = vst [vmem:[%s3 + $0x198] sm:$0xff] %v1071
    %1306 = vst [vmem:[%s3 + $0x1a0] sm:$0xff] %v1084
    %1307 = vst [vmem:[%s3 + $0x1a8] sm:$0xff] %v1097
    %1308 = vst [vmem:[%s3 + $0x1b0] sm:$0xff] %v1110
    %1309 = vst [vmem:[%s3 + $0x1b8] sm:$0xff] %v1123
    %1310 = vst [vmem:[%s3 + $0x1c0] sm:$0xff] %v1136
    %1311 = vst [vmem:[%s3 + $0x1c8] sm:$0xff] %v1149
    %1312 = vst [vmem:[%s3 + $0x1d0] sm:$0xff] %v1162
    %1313 = vst [vmem:[%s3 + $0x1d8] sm:$0xff] %v1175
    %1314 = vst [vmem:[%s3 + $0x1e0] sm:$0xff] %v1188
    %1315 = vst [vmem:[%s3 + $0x1e8] sm:$0xff] %v1201
    %1316 = vst [vmem:[%s3 + $0x1f0] sm:$0xff] %v1214
    %1317 = vst [vmem:[%s3 + $0x1f8] sm:$0xff] %v1227
    %1318 = vst [vmem:[%s3 + $0x200] sm:$0xff] %v1240
    %1319 = vst [vmem:[%s3 + $0x208] sm:$0xff] %v1253
    // Predicated region
    $region18: #{_lambda_.1} parent=1 // pred_check
      _
    $region19: #{_lambda_.1} parent=1 // pred_check_branch
      %1321 = sbr.rel (0) target = $region21
    $region20: #{_lambda_.1} parent=1 // pred_region
      _
    $region21: #{_lambda_.1} parent=1 // pred_fallthru
      _
    // Predicated region
    $region22: #{_lambda_.1} parent=1 // pred_check
      _
    $region23: #{_lambda_.1} parent=1 // pred_check_branch
      %1323 = sbr.rel (0) target = $region25
    $region24: #{_lambda_.1} parent=1 // pred_region
      _
    $region25: #{_lambda_.1} parent=1 // pred_fallthru
      _
    %1324 = vsyncpa [#allocation3], 1

</llo_original>
